<compile_context>
chip_gen: v6e
topology: v6e:2x2x1
jax: 0.10.0
libtpu: 0.0.40
codegen_flags: <defaults>
</compile_context>

<pallas_src>
import functools

import jax
import jax.numpy as jnp
import numpy as np
from jax.experimental import pallas as pl
from jax.experimental.pallas import tpu as pltpu


# ---------------------------------------------------------------------------
# Host-side construction of the 1-D upfirdn operator matrix
# ---------------------------------------------------------------------------
def _upfirdn1d_matrix(k1d, up, pad0, pad1, in_len):
    """Dense (out_len, in_len) matrix of the 1-D op: zero-insert(up) -> pad -> FIR."""
    k = np.asarray(k1d, dtype=np.float64)
    kflip = k[::-1]                       # upfirdn2d convolves with the flipped kernel
    ksize = k.shape[0]
    out_len = in_len * up + pad0 + pad1 - ksize + 1
    m = np.zeros((out_len, in_len), dtype=np.float64)
    for o in range(out_len):
        for j in range(ksize):
            p = o + j - pad0              # position in the zero-inserted signal
            if 0 <= p < in_len * up and p % up == 0:
                m[o, p // up] += kflip[j]
    return m.astype(np.float32)


# ---------------------------------------------------------------------------
# Tile selection against a VMEM budget (accounts for (8,128) tile padding)
# ---------------------------------------------------------------------------
_NT_MAX = 32                      # cap on images per grid step (kernel loop is unrolled)
_TILE_BUDGET = 4 << 20            # single-buffer per-step budget (bytes)


def _padded_elems(shape):
    s = list(shape)
    s[-1] = -(-s[-1] // 128) * 128
    if len(s) >= 2:
        s[-2] = -(-s[-2] // 8) * 8
    n = 1
    for d in s:
        n *= d
    return n


def _tile_vmem_bytes(nt, ht, H, W, WO):
    return 4 * (_padded_elems((nt, H, W)) + _padded_elems((nt, ht, WO))
                + _padded_elems((ht, H)) + _padded_elems((W, WO)))


def _largest_divisor_leq(n, cap):
    cap = max(1, min(cap, n))
    for d in range(cap, 0, -1):
        if n % d == 0:
            return d
    return 1


def _pick_tiles(N, H, W, HO, WO, budget_bytes=_TILE_BUDGET):
    # Prefer >=2 grid slices over images (pipelining + v7x megacore) when possible.
    cap = min(_NT_MAX, N if N < 2 else max(1, N // 2))
    nt = _largest_divisor_leq(N, cap)
    ht = HO
    while nt > 1 and _tile_vmem_bytes(nt, ht, H, W, WO) > budget_bytes:
        nt = _largest_divisor_leq(N, nt - 1)
    if _tile_vmem_bytes(nt, ht, H, W, WO) > budget_bytes:
        # Also tile the output rows (row block must be a multiple of 8 or full).
        for d in range(HO, 7, -1):
            if HO % d == 0 and d % 8 == 0 and _tile_vmem_bytes(nt, d, H, W, WO) <= budget_bytes:
                ht = d
                break
    return nt, ht


# ---------------------------------------------------------------------------
# Pallas kernel
# ---------------------------------------------------------------------------
def _upfirdn_matmul_kernel(x_ref, v_ref, wt_ref, o_ref):
    # x_ref : (NT, H, W)    input images (full H, W) - reused across row tiles
    # v_ref : (HT, H)       row block of the H-axis upfirdn matrix
    # wt_ref: (W,  WO)      transposed W-axis upfirdn matrix (whole)
    # o_ref : (NT, HT, WO)  output tile (already phase-interleaved, lane-dense)
    v = v_ref[...]
    wt = wt_ref[...]
    for n in range(x_ref.shape[0]):                      # static unroll (NT <= 32)
        t = jnp.dot(v, x_ref[n], preferred_element_type=jnp.float32)    # (HT, W)
        o_ref[n] = jnp.dot(t, wt, preferred_element_type=jnp.float32)   # (HT, WO)


# ---------------------------------------------------------------------------
# Public wrapper (matches Upsample.forward semantics, NCHW in / NCHW out)
# ---------------------------------------------------------------------------
def upsample(x, kernel=(1.0, 3.0, 3.0, 1.0), factor=2):
    x = jnp.asarray(x, jnp.float32)
    B, C, H, W = x.shape

    k1 = np.asarray(kernel, np.float64)
    if k1.ndim != 1:
        raise ValueError("expected a 1-D (separable) blur kernel")
    # make_kernel(k) * factor**2 with 1-D k is separable: (k1*factor/sum(k1)) per axis.
    k1d = k1 * factor / k1.sum()
    ksize = k1.shape[0]
    p = ksize - factor
    pad0 = (p + 1) // 2 + factor - 1
    pad1 = p // 2

    mh = _upfirdn1d_matrix(k1d, factor, pad0, pad1, H)       # (HO, H)
    mw = _upfirdn1d_matrix(k1d, factor, pad0, pad1, W)       # (WO, W)
    HO, WO = mh.shape[0], mw.shape[0]

    N = B * C
    x3 = x.reshape(N, H, W)                                  # free reshape, stays NCHW
    v = jnp.asarray(mh)                                      # (HO, H)
    wt = jnp.asarray(mw.T)                                   # (W, WO)

    nt, ht = _pick_tiles(N, H, W, HO, WO)
    grid = (N // nt, HO // ht)

    fp = _tile_vmem_bytes(nt, ht, H, W, WO)
    vmem_limit = int(min(100 << 20, max(32 << 20, 2 * fp + (8 << 20))))

    out3 = pl.pallas_call(
        _upfirdn_matmul_kernel,
        out_shape=jax.ShapeDtypeStruct((N, HO, WO), jnp.float32),
        grid=grid,
        in_specs=[
            # Full-H/W image tile; index map constant in j -> DMA'd once per i.
            pl.BlockSpec((nt, H, W), lambda i, j: (i, 0, 0)),
            pl.BlockSpec((ht, H), lambda i, j: (j, 0)),
            pl.BlockSpec((W, WO), lambda i, j: (0, 0)),
        ],
        out_specs=pl.BlockSpec((nt, ht, WO), lambda i, j: (i, j, 0)),
        compiler_params=pltpu.CompilerParams(
            dimension_semantics=("parallel", "parallel"),
            vmem_limit_bytes=vmem_limit,
        ),
    )(x3, v, wt)

    return out3.reshape(B, C, HO, WO)


# ---------------------------------------------------------------------------
# Pure-JAX reference (direct transcription of upfirdn2d_native) for validation
# ---------------------------------------------------------------------------
def upsample_ref(x, kernel=(1.0, 3.0, 3.0, 1.0), factor=2):
    k1 = np.asarray(kernel, np.float64)
    k2 = np.outer(k1, k1)
    k2 = k2 / k2.sum() * (factor ** 2)
    ks = k2.shape[0]
    p = ks - factor
    pad0 = (p + 1) // 2 + factor - 1
    pad1 = p // 2
    B, C, H, W = x.shape
    up = jnp.zeros((B, C, H * factor, W * factor), jnp.float32)
    up = up.at[:, :, ::factor, ::factor].set(x)
    up = jnp.pad(up, ((0, 0), (0, 0), (pad0, pad1), (pad0, pad1)))
    kf = k2[::-1, ::-1]
    HO = H * factor + pad0 + pad1 - ks + 1
    WO = W * factor + pad0 + pad1 - ks + 1
    out = jnp.zeros((B, C, HO, WO), jnp.float32)
    for i in range(ks):
        for j in range(ks):
            out = out + float(kf[i, j]) * up[:, :, i:i + HO, j:j + WO]
    return out


if __name__ == "__main__":
    B, C, H, W = 2, 4, 16, 16
    key = jax.random.PRNGKey(0)
    x = jax.random.normal(key, (B, C, H, W), jnp.float32)

    fn = jax.jit(functools.partial(upsample, kernel=(1.0, 3.0, 3.0, 1.0), factor=2))
    out = jax.block_until_ready(fn(x))

    assert out.shape == (B, C, 2 * H, 2 * W), out.shape
    assert bool(jnp.all(jnp.isfinite(out)))

    ref = jax.block_until_ready(upsample_ref(x))
    np.testing.assert_allclose(np.asarray(out), np.asarray(ref), rtol=2e-2, atol=2e-2)

    print("KERNEL_OK")
</pallas_src>

<mosaic_0001>
module attributes {stable_mosaic.version = 11 : i64} {
  func.func @_upfirdn_matmul_kernel(%arg0: i32, %arg1: i32, %arg2: memref<4x16x16xf32, #tpu.memory_space<vmem>>, %arg3: memref<32x16xf32, #tpu.memory_space<vmem>>, %arg4: memref<16x32xf32, #tpu.memory_space<vmem>>, %arg5: memref<4x32x32xf32, #tpu.memory_space<vmem>>) attributes {dimension_semantics = [#tpu.dimension_semantics<parallel>, #tpu.dimension_semantics<parallel>], iteration_bounds = array<i64: 2, 1>, scalar_prefetch = 0 : i64, scratch_operands = 0 : i64, tpu.core_type = #tpu.core_type<tc>, window_params = [{transform_indices = @transform_0, window_bounds = array<i64: 4, 16, 16>}, {transform_indices = @transform_1, window_bounds = array<i64: 32, 16>}, {pipeline_mode = #tpu.pipeline_mode<synchronous>, transform_indices = @transform_2, window_bounds = array<i64: 16, 32>}, {transform_indices = @transform_3, window_bounds = array<i64: 4, 32, 32>}]} {
    %c0 = arith.constant 0 : index
    %c0_0 = arith.constant 0 : index
    %0 = vector.load %arg3[%c0, %c0_0] : memref<32x16xf32, #tpu.memory_space<vmem>>, vector<32x16xf32>
    %c0_1 = arith.constant 0 : index
    %c0_2 = arith.constant 0 : index
    %1 = vector.load %arg4[%c0_1, %c0_2] : memref<16x32xf32, #tpu.memory_space<vmem>>, vector<16x32xf32>
    %c0_3 = arith.constant 0 : index
    %c0_4 = arith.constant 0 : index
    %c0_5 = arith.constant 0 : index
    %2 = vector.load %arg2[%c0_3, %c0_4, %c0_5] : memref<4x16x16xf32, #tpu.memory_space<vmem>>, vector<1x16x16xf32>
    %3 = vector.shape_cast %2 : vector<1x16x16xf32> to vector<16x16xf32>
    %cst = arith.constant dense<0.000000e+00> : vector<32x16xf32>
    %4 = tpu.matmul %0, %3, %cst {dimension_numbers = #tpu.dot_dimension_numbers<[1], [0], [0], [1], [0, 0, 1, 1], [], []>} : vector<32x16xf32>, vector<16x16xf32>, vector<32x16xf32> -> vector<32x16xf32>
    %cst_6 = arith.constant dense<0.000000e+00> : vector<32x32xf32>
    %5 = tpu.matmul %4, %1, %cst_6 {dimension_numbers = #tpu.dot_dimension_numbers<[1], [0], [0], [1], [0, 0, 1, 1], [], []>} : vector<32x16xf32>, vector<16x32xf32>, vector<32x32xf32> -> vector<32x32xf32>
    %c0_7 = arith.constant 0 : index
    %c0_8 = arith.constant 0 : index
    %c0_9 = arith.constant 0 : index
    %6 = vector.load %arg5[%c0_7, %c0_8, %c0_9] : memref<4x32x32xf32, #tpu.memory_space<vmem>>, vector<1x32x32xf32>
    %7 = vector.shape_cast %6 : vector<1x32x32xf32> to vector<32x32xf32>
    %8 = vector.shape_cast %5 : vector<32x32xf32> to vector<1x32x32xf32>
    tpu.vector_store %arg5[%c0_7, %c0_8, %c0_9], %8 {strides = array<i32>} : memref<4x32x32xf32, #tpu.memory_space<vmem>>, vector<1x32x32xf32>,
    %c1 = arith.constant 1 : index
    %c0_10 = arith.constant 0 : index
    %c0_11 = arith.constant 0 : index
    %9 = vector.load %arg2[%c1, %c0_10, %c0_11] : memref<4x16x16xf32, #tpu.memory_space<vmem>>, vector<1x16x16xf32>
    %10 = vector.shape_cast %9 : vector<1x16x16xf32> to vector<16x16xf32>
    %cst_12 = arith.constant dense<0.000000e+00> : vector<32x16xf32>
    %11 = tpu.matmul %0, %10, %cst_12 {dimension_numbers = #tpu.dot_dimension_numbers<[1], [0], [0], [1], [0, 0, 1, 1], [], []>} : vector<32x16xf32>, vector<16x16xf32>, vector<32x16xf32> -> vector<32x16xf32>
    %cst_13 = arith.constant dense<0.000000e+00> : vector<32x32xf32>
    %12 = tpu.matmul %11, %1, %cst_13 {dimension_numbers = #tpu.dot_dimension_numbers<[1], [0], [0], [1], [0, 0, 1, 1], [], []>} : vector<32x16xf32>, vector<16x32xf32>, vector<32x32xf32> -> vector<32x32xf32>
    %c1_14 = arith.constant 1 : index
    %c0_15 = arith.constant 0 : index
    %c0_16 = arith.constant 0 : index
    %13 = vector.load %arg5[%c1_14, %c0_15, %c0_16] : memref<4x32x32xf32, #tpu.memory_space<vmem>>, vector<1x32x32xf32>
    %14 = vector.shape_cast %13 : vector<1x32x32xf32> to vector<32x32xf32>
    %15 = vector.shape_cast %12 : vector<32x32xf32> to vector<1x32x32xf32>
    tpu.vector_store %arg5[%c1_14, %c0_15, %c0_16], %15 {strides = array<i32>} : memref<4x32x32xf32, #tpu.memory_space<vmem>>, vector<1x32x32xf32>,
    %c2 = arith.constant 2 : index
    %c0_17 = arith.constant 0 : index
    %c0_18 = arith.constant 0 : index
    %16 = vector.load %arg2[%c2, %c0_17, %c0_18] : memref<4x16x16xf32, #tpu.memory_space<vmem>>, vector<1x16x16xf32>
    %17 = vector.shape_cast %16 : vector<1x16x16xf32> to vector<16x16xf32>
    %cst_19 = arith.constant dense<0.000000e+00> : vector<32x16xf32>
    %18 = tpu.matmul %0, %17, %cst_19 {dimension_numbers = #tpu.dot_dimension_numbers<[1], [0], [0], [1], [0, 0, 1, 1], [], []>} : vector<32x16xf32>, vector<16x16xf32>, vector<32x16xf32> -> vector<32x16xf32>
    %cst_20 = arith.constant dense<0.000000e+00> : vector<32x32xf32>
    %19 = tpu.matmul %18, %1, %cst_20 {dimension_numbers = #tpu.dot_dimension_numbers<[1], [0], [0], [1], [0, 0, 1, 1], [], []>} : vector<32x16xf32>, vector<16x32xf32>, vector<32x32xf32> -> vector<32x32xf32>
    %c2_21 = arith.constant 2 : index
    %c0_22 = arith.constant 0 : index
    %c0_23 = arith.constant 0 : index
    %20 = vector.load %arg5[%c2_21, %c0_22, %c0_23] : memref<4x32x32xf32, #tpu.memory_space<vmem>>, vector<1x32x32xf32>
    %21 = vector.shape_cast %20 : vector<1x32x32xf32> to vector<32x32xf32>
    %22 = vector.shape_cast %19 : vector<32x32xf32> to vector<1x32x32xf32>
    tpu.vector_store %arg5[%c2_21, %c0_22, %c0_23], %22 {strides = array<i32>} : memref<4x32x32xf32, #tpu.memory_space<vmem>>, vector<1x32x32xf32>,
    %c3 = arith.constant 3 : index
    %c0_24 = arith.constant 0 : index
    %c0_25 = arith.constant 0 : index
    %23 = vector.load %arg2[%c3, %c0_24, %c0_25] : memref<4x16x16xf32, #tpu.memory_space<vmem>>, vector<1x16x16xf32>
    %24 = vector.shape_cast %23 : vector<1x16x16xf32> to vector<16x16xf32>
    %cst_26 = arith.constant dense<0.000000e+00> : vector<32x16xf32>
    %25 = tpu.matmul %0, %24, %cst_26 {dimension_numbers = #tpu.dot_dimension_numbers<[1], [0], [0], [1], [0, 0, 1, 1], [], []>} : vector<32x16xf32>, vector<16x16xf32>, vector<32x16xf32> -> vector<32x16xf32>
    %cst_27 = arith.constant dense<0.000000e+00> : vector<32x32xf32>
    %26 = tpu.matmul %25, %1, %cst_27 {dimension_numbers = #tpu.dot_dimension_numbers<[1], [0], [0], [1], [0, 0, 1, 1], [], []>} : vector<32x16xf32>, vector<16x32xf32>, vector<32x32xf32> -> vector<32x32xf32>
    %c3_28 = arith.constant 3 : index
    %c0_29 = arith.constant 0 : index
    %c0_30 = arith.constant 0 : index
    %27 = vector.load %arg5[%c3_28, %c0_29, %c0_30] : memref<4x32x32xf32, #tpu.memory_space<vmem>>, vector<1x32x32xf32>
    %28 = vector.shape_cast %27 : vector<1x32x32xf32> to vector<32x32xf32>
    %29 = vector.shape_cast %26 : vector<32x32xf32> to vector<1x32x32xf32>
    tpu.vector_store %arg5[%c3_28, %c0_29, %c0_30], %29 {strides = array<i32>} : memref<4x32x32xf32, #tpu.memory_space<vmem>>, vector<1x32x32xf32>,
    return
  }
  func.func @transform_0(%arg0: i32, %arg1: i32) -> (i32, i32, i32) {
    %c0_i32 = arith.constant 0 : i32
    %c0_i32_0 = arith.constant 0 : i32
    %c0_i32_1 = arith.constant 0 : i32
    return %arg0, %c0_i32, %c0_i32_0 : i32, i32, i32
  }
  func.func @transform_1(%arg0: i32, %arg1: i32) -> (i32, i32) {
    %c0_i32 = arith.constant 0 : i32
    %c0_i32_0 = arith.constant 0 : i32
    return %arg1, %c0_i32 : i32, i32
  }
  func.func @transform_2(%arg0: i32, %arg1: i32) -> (i32, i32) {
    %c0_i32 = arith.constant 0 : i32
    %c0_i32_0 = arith.constant 0 : i32
    %c0_i32_1 = arith.constant 0 : i32
    return %c0_i32, %c0_i32_0 : i32, i32
  }
  func.func @transform_3(%arg0: i32, %arg1: i32) -> (i32, i32, i32) {
    %c0_i32 = arith.constant 0 : i32
    %c0_i32_0 = arith.constant 0 : i32
    return %arg0, %arg1, %c0_i32 : i32, i32, i32
  }
}

</mosaic_0001>

<llo_original>
// kernel: upsample.1
$region0: #{upsample.1}
  #allocation0 [shape = 'u32[]', space=smem, size = 0x4, offset = 0x4, fixed_abs, tag = 'smem constant byte address 0x4 - core index']
  #allocation1 [shape = 'u32[144,128]{1,0:T(1,128)}', space=vmem, size = 0x12000, scoped, tag = 'internal scratch']
  %s0 = inlined_call_operand.hbm [shape: f32[8,16,16], index: 0, kind: input, shape index: {}]
  %s1 = inlined_call_operand.hbm [shape: f32[32,16], index: 1, kind: input, shape index: {}]
  %s2 = inlined_call_operand.hbm [shape: f32[16,32], index: 2, kind: input, shape index: {}]
  %s3 = inlined_call_operand.hbm [shape: f32[8,32,32], index: 3, kind: output, shape index: {}]
  %s4 = sld [smem:[#allocation0]]
  $region57: #{upsample.1} parent=0
    _
  %s6 = ssub.s32 1, %s4
  %s7 = scalar_select 0, %s6, %s4
  $region1: #{upsample.1} parent=0
    #allocation2 [shape = 'u8[65536]{0}', space=vmem, size = 0x10000, scoped, tag = 'input window, operand 0']
    #allocation3 [shape = 's32[2]{0}', space=sflag, size = 0x8, scoped, tag = 'scoped memory for upsample.1']
    #allocation4 [shape = 's32[2]{0}', space=sflag, size = 0x8, scoped, tag = 'scoped memory for upsample.1']
    #allocation5 [shape = 'u8[16384]{0}', space=vmem, size = 0x4000, scoped, tag = 'input window, operand 1, single buffered']
    #allocation6 [shape = 's32[1]{0}', space=sflag, size = 0x4, scoped, tag = 'scoped memory for upsample.1']
    #allocation7 [shape = 'u8[8192]{0}', space=vmem, size = 0x2000, scoped, tag = 'input window, operand 2, single buffered']
    #allocation8 [shape = 'u8[131072]{0}', space=vmem, size = 0x20000, scoped, tag = 'output window, operand 0']
    %8 = vsyncpa [#allocation3], 0
    %s9 = scalar_lea.sflag [#allocation3], 1
    %10 = vsyncpa %s9, 0
    %11 = vsyncpa [#allocation6], 0
    %12 = vsyncpa [#allocation4], 0
    %s13 = scalar_lea.sflag [#allocation4], 1
    %14 = vsyncpa %s13, 0
    loop: start=0, step=1, limit=4
    $region2: #{upsample.1} parent=1 // loop_pre_header
      _
    $region3: #{upsample.1} parent=1 // loop_header
      %s16 = sphi 0, %s20
      %p17 = scmp.ge.s32.totalorder %s16, 4
      %s23 = sphi 0, %s35
      %s24 = sphi 0, %s31
      %s25 = sphi 0, %s23
      %s26 = sphi 0, %s24
      %s27 = sphi 0, %s25
      %s28 = sphi 0, %s26
      %s38 = sphi 0, %s40
      %s41 = sphi 0, %s38
      %s42 = sphi 0, %s41
      %s58 = sphi 0, %s42
      %s64 = sphi 0, %s66
      %s67 = sphi 0, %s64
      %s68 = sphi 0, %s67
      %s84 = sphi 0, %s68
      %s88 = sphi 0, %s88
      %s90 = sphi 0, %s88
      %s91 = sphi 0, %s90
      %s105 = sphi 0, %s91
      %s113 = sphi 0, %s115
      %s116 = sphi 0, %s113
      %s117 = sphi 0, %s116
      %s133 = sphi 0, %s117
    $region4: #{upsample.1} parent=1 // loop_header_branch
      %19 = sbr.rel (%p17) target = $region8
    $region5: #{upsample.1} parent=1 // loop_body
      %s21 = ssub.s32 %s16, 1
      %s22 = ssub.s32 %s16, 2
      %s29 = sadd.s32 1, %s24
      %p30 = scmp.ge.s32.totalorder %s29, 1
      %s31 = scalar_select %p30, 0, %s29
      %s32 = sadd.s32 1, %s23
      %s33 = scalar_select %p30, %s32, %s23
      %p34 = scmp.ge.s32.totalorder %s33, 2
      %s35 = scalar_select %p34, 0, %s33
      %s36 = ssub.s32 %s23, %s35
      %p37 = scmp.eq.s32.totalorder %s36, 0
      %s39 = sadd.s32 %s38, 1
      %s40 = scalar_select %p37, %s38, %s39
      %p43 = pneg %p37
      %p44 = scmp.eq.s32.totalorder %s16, 1
      %p45 = por %p43, %p44
      %p46 = scmp.ne.s32.totalorder %s38, %s41
      %p47 = scmp.eq.s32.totalorder %s16, 0
      %p48 = por %p46, %p47
      %p49 = scmp.ne.s32.totalorder %s38, %s41
      %p50 = scmp.eq.s32.totalorder %s21, 1
      %p51 = por %p49, %p50
      %p52 = scmp.ne.s32.totalorder %s41, %s42
      %p53 = scmp.eq.s32.totalorder %s21, 0
      %p54 = por %p52, %p53
      %p55 = scmp.ne.s32.totalorder %s41, %s42
      %p56 = scmp.eq.s32.totalorder %s22, 1
      %p57 = por %p55, %p56
      %p59 = scmp.ne.s32.totalorder %s42, %s58
      %p60 = scmp.eq.s32.totalorder %s22, 0
      %p61 = por %p59, %p60
      %s62 = ssub.s32 %s24, %s31
      %p63 = scmp.eq.s32.totalorder %s62, 0
      %s65 = sadd.s32 %s64, 1
      %s66 = scalar_select %p63, %s64, %s65
      %p69 = pneg %p63
      %p70 = scmp.eq.s32.totalorder %s16, 1
      %p71 = por %p69, %p70
      %p72 = scmp.ne.s32.totalorder %s64, %s67
      %p73 = scmp.eq.s32.totalorder %s16, 0
      %p74 = por %p72, %p73
      %p75 = scmp.ne.s32.totalorder %s64, %s67
      %p76 = scmp.eq.s32.totalorder %s21, 1
      %p77 = por %p75, %p76
      %p78 = scmp.ne.s32.totalorder %s67, %s68
      %p79 = scmp.eq.s32.totalorder %s21, 0
      %p80 = por %p78, %p79
      %p81 = scmp.ne.s32.totalorder %s67, %s68
      %p82 = scmp.eq.s32.totalorder %s22, 1
      %p83 = por %p81, %p82
      %p85 = scmp.ne.s32.totalorder %s68, %s84
      %p86 = scmp.eq.s32.totalorder %s22, 0
      %p87 = por %p85, %p86
      %s89 = sadd.s32 %s88, 1
      %p92 = scmp.eq.s32.totalorder %s16, 1
      %p93 = scmp.ne.s32.totalorder %s88, %s90
      %p94 = scmp.eq.s32.totalorder %s16, 0
      %p95 = por %p93, %p94
      %p96 = scmp.ne.s32.totalorder %s88, %s90
      %p97 = scmp.eq.s32.totalorder %s21, 1
      %p98 = por %p96, %p97
      %p99 = scmp.ne.s32.totalorder %s90, %s91
      %p100 = scmp.eq.s32.totalorder %s21, 0
      %p101 = por %p99, %p100
      %p102 = scmp.ne.s32.totalorder %s90, %s91
      %p103 = scmp.eq.s32.totalorder %s22, 1
      %p104 = por %p102, %p103
      %p106 = scmp.ne.s32.totalorder %s91, %s105
      %p107 = scmp.eq.s32.totalorder %s22, 0
      %p108 = por %p106, %p107
      %s109 = ssub.s32 %s23, %s35
      %s110 = ssub.s32 %s24, %s31
      %s111 = sor.u32 %s109, %s110
      %p112 = scmp.eq.s32.totalorder %s111, 0
      %s114 = sadd.s32 %s113, 1
      %s115 = scalar_select %p112, %s113, %s114
      %p118 = pneg %p112
      %p119 = scmp.eq.s32.totalorder %s16, 1
      %p120 = por %p118, %p119
      %p121 = scmp.ne.s32.totalorder %s113, %s116
      %p122 = scmp.eq.s32.totalorder %s16, 0
      %p123 = por %p121, %p122
      %p124 = scmp.ne.s32.totalorder %s113, %s116
      %p125 = scmp.eq.s32.totalorder %s21, 1
      %p126 = por %p124, %p125
      %p127 = scmp.ne.s32.totalorder %s116, %s117
      %p128 = scmp.eq.s32.totalorder %s21, 0
      %p129 = por %p127, %p128
      %p130 = scmp.ne.s32.totalorder %s116, %s117
      %p131 = scmp.eq.s32.totalorder %s22, 1
      %p132 = por %p130, %p131
      %p134 = scmp.ne.s32.totalorder %s117, %s133
      %p135 = scmp.eq.s32.totalorder %s22, 0
      %p136 = por %p134, %p135
      %p137 = scmp.le.s32.totalorder 1, %s16
      %p138 = scmp.lt.s32.totalorder %s16, 3
      %p139 = pnand %p137, %p138
      %p140 = pneg %p139
      // Predicated region
      $region9: #{upsample.1} parent=5 // pred_check
        _
      $region10: #{upsample.1} parent=5 // pred_check_branch
        %142 = sbr.rel (%p139) target = $region12
      $region11: #{upsample.1} parent=5 // pred_region
        %s143 = ssub.s32 %s16, 1
        // Predicated region
        $region13: #{upsample.1} parent=11 // pred_check
          %p144 = pneg %p80
        $region14: #{upsample.1} parent=11 // pred_check_branch
          %146 = sbr.rel (%p144) target = $region16
        $region15: #{upsample.1} parent=11 // pred_region
          %s147 = smul.u32 4, %s26
          %s149 = ssub.s32 512, 512
          %150 = vsyncadd [#allocation6], %s149
          %s151 = smul.addr %s147, 128
          %s152 = scalar_lea.hbm %s1, %s151
          %s153 = sshll.u32 [#allocation5], 4
          %s154 = int_to_ptr.vmem [resolvable:$true] %s153
          %159 = dma.hbm_to_vmem [thread:$0]  %s152, 512, %s154, [#allocation6], 128, 128, 8
        $region16: #{upsample.1} parent=11 // pred_fallthru
          _
        // Predicated region
        $region17: #{upsample.1} parent=11 // pred_check
          %p160 = pneg %p101
        $region18: #{upsample.1} parent=11 // pred_check_branch
          %162 = sbr.rel (%p160) target = $region20
        $region19: #{upsample.1} parent=11 // pred_region
          %s164 = ssub.s32 256, 256
          %165 = vsyncadd [#allocation6], %s164
          %s166 = sshll.u32 [#allocation7], 4
          %s167 = int_to_ptr.vmem [resolvable:$true] %s166
          %172 = dma.hbm_to_vmem [thread:$0]  %s2, 256, %s167, [#allocation6], 128, 128, 8
        $region20: #{upsample.1} parent=11 // pred_fallthru
          _
      $region12: #{upsample.1} parent=5 // pred_fallthru
        _
      %p173 = scmp.lt.s32.totalorder %s16, 2
      // Predicated region
      $region21: #{upsample.1} parent=5 // pred_check
        %p174 = pneg %p173
      $region22: #{upsample.1} parent=5 // pred_check_branch
        %176 = sbr.rel (%p174) target = $region24
      $region23: #{upsample.1} parent=5 // pred_region
        // Predicated region
        $region25: #{upsample.1} parent=23 // pred_check
          %p177 = pneg %p48
        $region26: #{upsample.1} parent=23 // pred_check_branch
          %179 = sbr.rel (%p177) target = $region28
        $region27: #{upsample.1} parent=23 // pred_region
          %s180 = sand.u32 %s38, 1
          %s181 = scalar_lea.sflag [#allocation3], %s180
          %s182 = sand.u32 %s38, 1
          %s183 = smul.addr %s182, 64
          %s184 = scalar_lea.vmem [#allocation2], %s183
          %s185 = smul.u32 4, %s23
          %s187 = ssub.s32 1024, 1024
          %188 = vsyncadd %s181, %s187
          %s189 = smul.addr %s185, 2
          %s190 = smul.addr %s189, 128
          %s191 = scalar_lea.hbm %s0, %s190
          %s192 = sshll.u32 %s184, 4
          %s193 = int_to_ptr.vmem [resolvable:$true] %s192
          %198 = dma.hbm_to_vmem [thread:$0]  %s191, 1024, %s193, %s181, 128, 128, 8
        $region28: #{upsample.1} parent=23 // pred_fallthru
          _
      $region24: #{upsample.1} parent=5 // pred_fallthru
        _
      %p199 = scmp.le.s32.totalorder 1, %s16
      %p200 = scmp.lt.s32.totalorder %s16, 3
      %p201 = pnand %p199, %p200
      %p202 = pneg %p201
      // Predicated region
      $region29: #{upsample.1} parent=5 // pred_check
        _
      $region30: #{upsample.1} parent=5 // pred_check_branch
        %204 = sbr.rel (%p201) target = $region32
      $region31: #{upsample.1} parent=5 // pred_region
        %s205 = ssub.s32 %s16, 1
        %s206 = sand.u32 %s41, 1
        %s207 = scalar_lea.sflag [#allocation3], %s206
        %s208 = sand.u32 %s41, 1
        %s209 = smul.addr %s208, 64
        %s210 = scalar_lea.vmem [#allocation2], %s209
        // Predicated region
        $region33: #{upsample.1} parent=31 // pred_check
          %p211 = pneg %p54
        $region34: #{upsample.1} parent=31 // pred_check_branch
          %213 = sbr.rel (%p211) target = $region36
        $region35: #{upsample.1} parent=31 // pred_region
          %214 = dma.done %s207, 1024
        $region36: #{upsample.1} parent=31 // pred_fallthru
          _
        // Predicated region
        $region37: #{upsample.1} parent=31 // pred_check
          %p215 = pneg %p80
        $region38: #{upsample.1} parent=31 // pred_check_branch
          %217 = sbr.rel (%p215) target = $region40
        $region39: #{upsample.1} parent=31 // pred_region
          %218 = dma.done [#allocation6], 512
        $region40: #{upsample.1} parent=31 // pred_fallthru
          _
        // Predicated region
        $region41: #{upsample.1} parent=31 // pred_check
          %p219 = pneg %p101
        $region42: #{upsample.1} parent=31 // pred_check_branch
          %221 = sbr.rel (%p219) target = $region44
        $region43: #{upsample.1} parent=31 // pred_region
          %222 = dma.done [#allocation6], 256
        $region44: #{upsample.1} parent=31 // pred_fallthru
          _
        %s223 = sand.u32 %s41, 1
        %s224 = scalar_lea.sflag [#allocation3], %s223
        %s225 = sand.u32 %s41, 1
        %s226 = smul.addr %s225, 64
        %s227 = scalar_lea.vmem [#allocation2], %s226
        %p228 = pneg %p54
        %p229 = pneg %p51
        %p230 = pneg %p80
        %p231 = pneg %p77
        %p232 = pneg %p101
        %p233 = pneg %p98
        %p234 = pneg %p129
        %p235 = pneg %p126
        %s236 = sand.u32 %s116, 1
        %s237 = scalar_lea.sflag [#allocation4], %s236
        %s238 = sand.u32 %s116, 1
        %s239 = smul.addr %s238, 128
        %s240 = scalar_lea.vmem [#allocation8], %s239
        %s241 = smul.u32 4, %s25
        %s242 = smul.u32 4, %s26
        %s243 = smul.u32 4, %s25
        %s244 = smul.u32 4, %s26
        %v245 = vld [vmem:[#allocation5] sm:$0xff]
        %v246 = vld [vmem:[#allocation5 + $0x8] sm:$0xff]
        %v247 = vld [vmem:[#allocation5 + $0x10] sm:$0xff]
        %v248 = vld [vmem:[#allocation5 + $0x18] sm:$0xff]
        %v249 = vld [vmem:[#allocation7] sm:$0xff]
        %v250 = vld [vmem:[#allocation7 + $0x8] sm:$0xff]
        %v251 = vld [vmem:[%s210] sm:$0xff]
        %v252 = vld [vmem:[%s210 + $0x8] sm:$0xff]
        %vm253 = vcmask 130048
        %v255 = vsel %vm253, %v245, 0
        %v258 = vsel %vm253, %v246, 0
        %v261 = vsel %vm253, %v247, 0
        %v264 = vsel %vm253, %v248, 0
        %266 = vmatprep.subr.mxu0 0.0
        %267 = vmatpush1.msra.mxu0 0.0
        %268 = vmatprep.subr.mxu0 0.0
        %269 = vmatpush1.msra.mxu0 0.0
        %270 = vmatprep.subr.mxu0 0.0
        %271 = vmatpush1.msra.mxu0 0.0
        %272 = vmatprep.subr.mxu0 0.0
        %273 = vmatpush1.msra.mxu0 0.0
        %274 = vmatprep.subr.mxu0 0.0
        %275 = vmatpush1.msra.mxu0 0.0
        %276 = vmatprep.subr.mxu0 0.0
        %277 = vmatpush1.msra.mxu0 0.0
        %278 = vmatprep.subr.mxu0 0.0
        %279 = vmatpush1.msra.mxu0 0.0
        %280 = vmatprep.subr.mxu0 0.0
        %281 = vmatpush1.msra.mxu0 0.0
        %282 = vmatprep.subr.mxu0 0.0
        %283 = vmatpush1.msra.mxu0 0.0
        %284 = vmatprep.subr.mxu0 0.0
        %285 = vmatpush1.msra.mxu0 0.0
        %286 = vmatprep.subr.mxu0 0.0
        %287 = vmatpush1.msra.mxu0 0.0
        %288 = vmatprep.subr.mxu0 0.0
        %289 = vmatpush1.msra.mxu0 0.0
        %290 = vmatprep.subr.mxu0 0.0
        %291 = vmatpush1.msra.mxu0 0.0
        %292 = vmatprep.subr.mxu0 0.0
        %293 = vmatpush1.msra.mxu0 0.0
        %294 = vmatprep.subr.mxu0 0.0
        %295 = vmatpush1.msra.mxu0 %v252
        %296 = vmatprep.subr.mxu0 0.0
        %297 = vmatpush1.msra.mxu0 %v251
        %298 = vmatprep.subr.mxu0 0.0
        %299 = vmatpush2.msra.mxu0 0.0
        %300 = vmatprep.subr.mxu0 0.0
        %301 = vmatpush2.msra.mxu0 0.0
        %302 = vmatprep.subr.mxu0 0.0
        %303 = vmatpush2.msra.mxu0 0.0
        %304 = vmatprep.subr.mxu0 0.0
        %305 = vmatpush2.msra.mxu0 0.0
        %306 = vmatprep.subr.mxu0 0.0
        %307 = vmatpush2.msra.mxu0 0.0
        %308 = vmatprep.subr.mxu0 0.0
        %309 = vmatpush2.msra.mxu0 0.0
        %310 = vmatprep.subr.mxu0 0.0
        %311 = vmatpush2.msra.mxu0 0.0
        %312 = vmatprep.subr.mxu0 0.0
        %313 = vmatpush2.msra.mxu0 0.0
        %314 = vmatprep.subr.mxu0 0.0
        %315 = vmatpush2.msra.mxu0 0.0
        %316 = vmatprep.subr.mxu0 0.0
        %317 = vmatpush2.msra.mxu0 0.0
        %318 = vmatprep.subr.mxu0 0.0
        %319 = vmatpush2.msra.mxu0 0.0
        %320 = vmatprep.subr.mxu0 0.0
        %321 = vmatpush2.msra.mxu0 0.0
        %322 = vmatprep.subr.mxu0 0.0
        %323 = vmatpush2.msra.mxu0 0.0
        %324 = vmatprep.subr.mxu0 0.0
        %325 = vmatpush2.msra.mxu0 0.0
        %326 = vmatprep.subr.mxu0 0.0
        %327 = vmatpush2.msra.mxu0 0.0
        %328 = vmatprep.subr.mxu0 0.0
        %329 = vmatpush2.msra.mxu0 0.0
        %330 = vmatprep.mubr.f32.mxu0 0.0
        %331 = vmatmul.mubr.f32.gmra.mxu0 %v255
        %v332 = vpop.f32.mrf.mxu0
        %v333 = vadd.f32 0.0, %v332
        %v334 = vpop.f32.mrf.mxu0
        %335 = vmatprep.mubr.f32.mxu0 0.0
        %336 = vmatmul.mubr.f32.gmra.mxu0 %v258
        %v337 = vpop.f32.mrf.mxu0
        %v338 = vadd.f32 0.0, %v337
        %v339 = vpop.f32.mrf.mxu0
        %340 = vmatprep.mubr.f32.mxu0 0.0
        %341 = vmatmul.mubr.f32.gmra.mxu0 %v261
        %v342 = vpop.f32.mrf.mxu0
        %v343 = vadd.f32 0.0, %v342
        %v344 = vpop.f32.mrf.mxu0
        %345 = vmatprep.mubr.f32.mxu0 0.0
        %346 = vmatmul.mubr.f32.gmra.mxu0 %v264
        %v347 = vpop.f32.mrf.mxu0
        %v348 = vadd.f32 0.0, %v347
        %v349 = vpop.f32.mrf.mxu0
        %350 = vdwg.mxu0
        %v352 = vsel %vm253, %v333, 0
        %v355 = vsel %vm253, %v338, 0
        %v358 = vsel %vm253, %v343, 0
        %v361 = vsel %vm253, %v348, 0
        %363 = vmatprep.subr.mxu0 0.0
        %364 = vmatpush1.msra.mxu0 0.0
        %365 = vmatprep.subr.mxu0 0.0
        %366 = vmatpush1.msra.mxu0 0.0
        %367 = vmatprep.subr.mxu0 0.0
        %368 = vmatpush1.msra.mxu0 0.0
        %369 = vmatprep.subr.mxu0 0.0
        %370 = vmatpush1.msra.mxu0 0.0
        %371 = vmatprep.subr.mxu0 0.0
        %372 = vmatpush1.msra.mxu0 0.0
        %373 = vmatprep.subr.mxu0 0.0
        %374 = vmatpush1.msra.mxu0 0.0
        %375 = vmatprep.subr.mxu0 0.0
        %376 = vmatpush1.msra.mxu0 0.0
        %377 = vmatprep.subr.mxu0 0.0
        %378 = vmatpush1.msra.mxu0 0.0
        %379 = vmatprep.subr.mxu0 0.0
        %380 = vmatpush1.msra.mxu0 0.0
        %381 = vmatprep.subr.mxu0 0.0
        %382 = vmatpush1.msra.mxu0 0.0
        %383 = vmatprep.subr.mxu0 0.0
        %384 = vmatpush1.msra.mxu0 0.0
        %385 = vmatprep.subr.mxu0 0.0
        %386 = vmatpush1.msra.mxu0 0.0
        %387 = vmatprep.subr.mxu0 0.0
        %388 = vmatpush1.msra.mxu0 0.0
        %389 = vmatprep.subr.mxu0 0.0
        %390 = vmatpush1.msra.mxu0 0.0
        %391 = vmatprep.subr.mxu0 0.0
        %392 = vmatpush1.msra.mxu0 %v250
        %393 = vmatprep.subr.mxu0 0.0
        %394 = vmatpush1.msra.mxu0 %v249
        %395 = vmatprep.subr.mxu0 0.0
        %396 = vmatpush2.msra.mxu0 0.0
        %397 = vmatprep.subr.mxu0 0.0
        %398 = vmatpush2.msra.mxu0 0.0
        %399 = vmatprep.subr.mxu0 0.0
        %400 = vmatpush2.msra.mxu0 0.0
        %401 = vmatprep.subr.mxu0 0.0
        %402 = vmatpush2.msra.mxu0 0.0
        %403 = vmatprep.subr.mxu0 0.0
        %404 = vmatpush2.msra.mxu0 0.0
        %405 = vmatprep.subr.mxu0 0.0
        %406 = vmatpush2.msra.mxu0 0.0
        %407 = vmatprep.subr.mxu0 0.0
        %408 = vmatpush2.msra.mxu0 0.0
        %409 = vmatprep.subr.mxu0 0.0
        %410 = vmatpush2.msra.mxu0 0.0
        %411 = vmatprep.subr.mxu0 0.0
        %412 = vmatpush2.msra.mxu0 0.0
        %413 = vmatprep.subr.mxu0 0.0
        %414 = vmatpush2.msra.mxu0 0.0
        %415 = vmatprep.subr.mxu0 0.0
        %416 = vmatpush2.msra.mxu0 0.0
        %417 = vmatprep.subr.mxu0 0.0
        %418 = vmatpush2.msra.mxu0 0.0
        %419 = vmatprep.subr.mxu0 0.0
        %420 = vmatpush2.msra.mxu0 0.0
        %421 = vmatprep.subr.mxu0 0.0
        %422 = vmatpush2.msra.mxu0 0.0
        %423 = vmatprep.subr.mxu0 0.0
        %424 = vmatpush2.msra.mxu0 0.0
        %425 = vmatprep.subr.mxu0 0.0
        %426 = vmatpush2.msra.mxu0 0.0
        %427 = vmatprep.mubr.f32.mxu0 0.0
        %428 = vmatmul.mubr.f32.gmra.mxu0 %v352
        %v429 = vpop.f32.mrf.mxu0
        %v430 = vadd.f32 0.0, %v429
        %v431 = vpop.f32.mrf.mxu0
        %432 = vmatprep.mubr.f32.mxu0 0.0
        %433 = vmatmul.mubr.f32.gmra.mxu0 %v355
        %v434 = vpop.f32.mrf.mxu0
        %v435 = vadd.f32 0.0, %v434
        %v436 = vpop.f32.mrf.mxu0
        %437 = vmatprep.mubr.f32.mxu0 0.0
        %438 = vmatmul.mubr.f32.gmra.mxu0 %v358
        %v439 = vpop.f32.mrf.mxu0
        %v440 = vadd.f32 0.0, %v439
        %v441 = vpop.f32.mrf.mxu0
        %442 = vmatprep.mubr.f32.mxu0 0.0
        %443 = vmatmul.mubr.f32.gmra.mxu0 %v361
        %v444 = vpop.f32.mrf.mxu0
        %v445 = vadd.f32 0.0, %v444
        %v446 = vpop.f32.mrf.mxu0
        %447 = vdwg.mxu0
        %vm448 = vcmask 261120
        %449 = vst.msk [vmem:[%s240] sm:$0xff] %vm448, %v430
        %450 = vst.msk [vmem:[%s240 + $0x8] sm:$0xff] %vm448, %v435
        %451 = vst.msk [vmem:[%s240 + $0x10] sm:$0xff] %vm448, %v440
        %452 = vst.msk [vmem:[%s240 + $0x18] sm:$0xff] %vm448, %v445
        %s453 = scalar_lea.vmem %s210, 16 [#allocation2]
        %v454 = vld [vmem:[%s453] sm:$0xff]
        %v455 = vld [vmem:[%s453 + $0x8] sm:$0xff]
        %456 = vmatprep.subr.mxu0 0.0
        %457 = vmatpush1.msra.mxu0 0.0
        %458 = vmatprep.subr.mxu0 0.0
        %459 = vmatpush1.msra.mxu0 0.0
        %460 = vmatprep.subr.mxu0 0.0
        %461 = vmatpush1.msra.mxu0 0.0
        %462 = vmatprep.subr.mxu0 0.0
        %463 = vmatpush1.msra.mxu0 0.0
        %464 = vmatprep.subr.mxu0 0.0
        %465 = vmatpush1.msra.mxu0 0.0
        %466 = vmatprep.subr.mxu0 0.0
        %467 = vmatpush1.msra.mxu0 0.0
        %468 = vmatprep.subr.mxu0 0.0
        %469 = vmatpush1.msra.mxu0 0.0
        %470 = vmatprep.subr.mxu0 0.0
        %471 = vmatpush1.msra.mxu0 0.0
        %472 = vmatprep.subr.mxu0 0.0
        %473 = vmatpush1.msra.mxu0 0.0
        %474 = vmatprep.subr.mxu0 0.0
        %475 = vmatpush1.msra.mxu0 0.0
        %476 = vmatprep.subr.mxu0 0.0
        %477 = vmatpush1.msra.mxu0 0.0
        %478 = vmatprep.subr.mxu0 0.0
        %479 = vmatpush1.msra.mxu0 0.0
        %480 = vmatprep.subr.mxu0 0.0
        %481 = vmatpush1.msra.mxu0 0.0
        %482 = vmatprep.subr.mxu0 0.0
        %483 = vmatpush1.msra.mxu0 0.0
        %484 = vmatprep.subr.mxu0 0.0
        %485 = vmatpush1.msra.mxu0 %v455
        %486 = vmatprep.subr.mxu0 0.0
        %487 = vmatpush1.msra.mxu0 %v454
        %488 = vmatprep.subr.mxu0 0.0
        %489 = vmatpush2.msra.mxu0 0.0
        %490 = vmatprep.subr.mxu0 0.0
        %491 = vmatpush2.msra.mxu0 0.0
        %492 = vmatprep.subr.mxu0 0.0
        %493 = vmatpush2.msra.mxu0 0.0
        %494 = vmatprep.subr.mxu0 0.0
        %495 = vmatpush2.msra.mxu0 0.0
        %496 = vmatprep.subr.mxu0 0.0
        %497 = vmatpush2.msra.mxu0 0.0
        %498 = vmatprep.subr.mxu0 0.0
        %499 = vmatpush2.msra.mxu0 0.0
        %500 = vmatprep.subr.mxu0 0.0
        %501 = vmatpush2.msra.mxu0 0.0
        %502 = vmatprep.subr.mxu0 0.0
        %503 = vmatpush2.msra.mxu0 0.0
        %504 = vmatprep.subr.mxu0 0.0
        %505 = vmatpush2.msra.mxu0 0.0
        %506 = vmatprep.subr.mxu0 0.0
        %507 = vmatpush2.msra.mxu0 0.0
        %508 = vmatprep.subr.mxu0 0.0
        %509 = vmatpush2.msra.mxu0 0.0
        %510 = vmatprep.subr.mxu0 0.0
        %511 = vmatpush2.msra.mxu0 0.0
        %512 = vmatprep.subr.mxu0 0.0
        %513 = vmatpush2.msra.mxu0 0.0
        %514 = vmatprep.subr.mxu0 0.0
        %515 = vmatpush2.msra.mxu0 0.0
        %516 = vmatprep.subr.mxu0 0.0
        %517 = vmatpush2.msra.mxu0 0.0
        %518 = vmatprep.subr.mxu0 0.0
        %519 = vmatpush2.msra.mxu0 0.0
        %520 = vmatprep.mubr.f32.mxu0 0.0
        %521 = vmatmul.mubr.f32.gmra.mxu0 %v255
        %v522 = vpop.f32.mrf.mxu0
        %v523 = vadd.f32 0.0, %v522
        %v524 = vpop.f32.mrf.mxu0
        %525 = vmatprep.mubr.f32.mxu0 0.0
        %526 = vmatmul.mubr.f32.gmra.mxu0 %v258
        %v527 = vpop.f32.mrf.mxu0
        %v528 = vadd.f32 0.0, %v527
        %v529 = vpop.f32.mrf.mxu0
        %530 = vmatprep.mubr.f32.mxu0 0.0
        %531 = vmatmul.mubr.f32.gmra.mxu0 %v261
        %v532 = vpop.f32.mrf.mxu0
        %v533 = vadd.f32 0.0, %v532
        %v534 = vpop.f32.mrf.mxu0
        %535 = vmatprep.mubr.f32.mxu0 0.0
        %536 = vmatmul.mubr.f32.gmra.mxu0 %v264
        %v537 = vpop.f32.mrf.mxu0
        %v538 = vadd.f32 0.0, %v537
        %v539 = vpop.f32.mrf.mxu0
        %540 = vdwg.mxu0
        %v542 = vsel %vm253, %v523, 0
        %v545 = vsel %vm253, %v528, 0
        %v548 = vsel %vm253, %v533, 0
        %v551 = vsel %vm253, %v538, 0
        %553 = vmatprep.subr.mxu0 0.0
        %554 = vmatpush1.msra.mxu0 0.0
        %555 = vmatprep.subr.mxu0 0.0
        %556 = vmatpush1.msra.mxu0 0.0
        %557 = vmatprep.subr.mxu0 0.0
        %558 = vmatpush1.msra.mxu0 0.0
        %559 = vmatprep.subr.mxu0 0.0
        %560 = vmatpush1.msra.mxu0 0.0
        %561 = vmatprep.subr.mxu0 0.0
        %562 = vmatpush1.msra.mxu0 0.0
        %563 = vmatprep.subr.mxu0 0.0
        %564 = vmatpush1.msra.mxu0 0.0
        %565 = vmatprep.subr.mxu0 0.0
        %566 = vmatpush1.msra.mxu0 0.0
        %567 = vmatprep.subr.mxu0 0.0
        %568 = vmatpush1.msra.mxu0 0.0
        %569 = vmatprep.subr.mxu0 0.0
        %570 = vmatpush1.msra.mxu0 0.0
        %571 = vmatprep.subr.mxu0 0.0
        %572 = vmatpush1.msra.mxu0 0.0
        %573 = vmatprep.subr.mxu0 0.0
        %574 = vmatpush1.msra.mxu0 0.0
        %575 = vmatprep.subr.mxu0 0.0
        %576 = vmatpush1.msra.mxu0 0.0
        %577 = vmatprep.subr.mxu0 0.0
        %578 = vmatpush1.msra.mxu0 0.0
        %579 = vmatprep.subr.mxu0 0.0
        %580 = vmatpush1.msra.mxu0 0.0
        %581 = vmatprep.subr.mxu0 0.0
        %582 = vmatpush1.msra.mxu0 %v250
        %583 = vmatprep.subr.mxu0 0.0
        %584 = vmatpush1.msra.mxu0 %v249
        %585 = vmatprep.subr.mxu0 0.0
        %586 = vmatpush2.msra.mxu0 0.0
        %587 = vmatprep.subr.mxu0 0.0
        %588 = vmatpush2.msra.mxu0 0.0
        %589 = vmatprep.subr.mxu0 0.0
        %590 = vmatpush2.msra.mxu0 0.0
        %591 = vmatprep.subr.mxu0 0.0
        %592 = vmatpush2.msra.mxu0 0.0
        %593 = vmatprep.subr.mxu0 0.0
        %594 = vmatpush2.msra.mxu0 0.0
        %595 = vmatprep.subr.mxu0 0.0
        %596 = vmatpush2.msra.mxu0 0.0
        %597 = vmatprep.subr.mxu0 0.0
        %598 = vmatpush2.msra.mxu0 0.0
        %599 = vmatprep.subr.mxu0 0.0
        %600 = vmatpush2.msra.mxu0 0.0
        %601 = vmatprep.subr.mxu0 0.0
        %602 = vmatpush2.msra.mxu0 0.0
        %603 = vmatprep.subr.mxu0 0.0
        %604 = vmatpush2.msra.mxu0 0.0
        %605 = vmatprep.subr.mxu0 0.0
        %606 = vmatpush2.msra.mxu0 0.0
        %607 = vmatprep.subr.mxu0 0.0
        %608 = vmatpush2.msra.mxu0 0.0
        %609 = vmatprep.subr.mxu0 0.0
        %610 = vmatpush2.msra.mxu0 0.0
        %611 = vmatprep.subr.mxu0 0.0
        %612 = vmatpush2.msra.mxu0 0.0
        %613 = vmatprep.subr.mxu0 0.0
        %614 = vmatpush2.msra.mxu0 0.0
        %615 = vmatprep.subr.mxu0 0.0
        %616 = vmatpush2.msra.mxu0 0.0
        %617 = vmatprep.mubr.f32.mxu0 0.0
        %618 = vmatmul.mubr.f32.gmra.mxu0 %v542
        %v619 = vpop.f32.mrf.mxu0
        %v620 = vadd.f32 0.0, %v619
        %v621 = vpop.f32.mrf.mxu0
        %622 = vmatprep.mubr.f32.mxu0 0.0
        %623 = vmatmul.mubr.f32.gmra.mxu0 %v545
        %v624 = vpop.f32.mrf.mxu0
        %v625 = vadd.f32 0.0, %v624
        %v626 = vpop.f32.mrf.mxu0
        %627 = vmatprep.mubr.f32.mxu0 0.0
        %628 = vmatmul.mubr.f32.gmra.mxu0 %v548
        %v629 = vpop.f32.mrf.mxu0
        %v630 = vadd.f32 0.0, %v629
        %v631 = vpop.f32.mrf.mxu0
        %632 = vmatprep.mubr.f32.mxu0 0.0
        %633 = vmatmul.mubr.f32.gmra.mxu0 %v551
        %v634 = vpop.f32.mrf.mxu0
        %v635 = vadd.f32 0.0, %v634
        %v636 = vpop.f32.mrf.mxu0
        %637 = vdwg.mxu0
        %s638 = scalar_lea.vmem %s240, 32 [#allocation8]
        %639 = vst.msk [vmem:[%s638] sm:$0xff] %vm448, %v620
        %640 = vst.msk [vmem:[%s638 + $0x8] sm:$0xff] %vm448, %v625
        %641 = vst.msk [vmem:[%s638 + $0x10] sm:$0xff] %vm448, %v630
        %642 = vst.msk [vmem:[%s638 + $0x18] sm:$0xff] %vm448, %v635
        %s643 = scalar_lea.vmem %s210, 32 [#allocation2]
        %v644 = vld [vmem:[%s643] sm:$0xff]
        %v645 = vld [vmem:[%s643 + $0x8] sm:$0xff]
        %646 = vmatprep.subr.mxu0 0.0
        %647 = vmatpush1.msra.mxu0 0.0
        %648 = vmatprep.subr.mxu0 0.0
        %649 = vmatpush1.msra.mxu0 0.0
        %650 = vmatprep.subr.mxu0 0.0
        %651 = vmatpush1.msra.mxu0 0.0
        %652 = vmatprep.subr.mxu0 0.0
        %653 = vmatpush1.msra.mxu0 0.0
        %654 = vmatprep.subr.mxu0 0.0
        %655 = vmatpush1.msra.mxu0 0.0
        %656 = vmatprep.subr.mxu0 0.0
        %657 = vmatpush1.msra.mxu0 0.0
        %658 = vmatprep.subr.mxu0 0.0
        %659 = vmatpush1.msra.mxu0 0.0
        %660 = vmatprep.subr.mxu0 0.0
        %661 = vmatpush1.msra.mxu0 0.0
        %662 = vmatprep.subr.mxu0 0.0
        %663 = vmatpush1.msra.mxu0 0.0
        %664 = vmatprep.subr.mxu0 0.0
        %665 = vmatpush1.msra.mxu0 0.0
        %666 = vmatprep.subr.mxu0 0.0
        %667 = vmatpush1.msra.mxu0 0.0
        %668 = vmatprep.subr.mxu0 0.0
        %669 = vmatpush1.msra.mxu0 0.0
        %670 = vmatprep.subr.mxu0 0.0
        %671 = vmatpush1.msra.mxu0 0.0
        %672 = vmatprep.subr.mxu0 0.0
        %673 = vmatpush1.msra.mxu0 0.0
        %674 = vmatprep.subr.mxu0 0.0
        %675 = vmatpush1.msra.mxu0 %v645
        %676 = vmatprep.subr.mxu0 0.0
        %677 = vmatpush1.msra.mxu0 %v644
        %678 = vmatprep.subr.mxu0 0.0
        %679 = vmatpush2.msra.mxu0 0.0
        %680 = vmatprep.subr.mxu0 0.0
        %681 = vmatpush2.msra.mxu0 0.0
        %682 = vmatprep.subr.mxu0 0.0
        %683 = vmatpush2.msra.mxu0 0.0
        %684 = vmatprep.subr.mxu0 0.0
        %685 = vmatpush2.msra.mxu0 0.0
        %686 = vmatprep.subr.mxu0 0.0
        %687 = vmatpush2.msra.mxu0 0.0
        %688 = vmatprep.subr.mxu0 0.0
        %689 = vmatpush2.msra.mxu0 0.0
        %690 = vmatprep.subr.mxu0 0.0
        %691 = vmatpush2.msra.mxu0 0.0
        %692 = vmatprep.subr.mxu0 0.0
        %693 = vmatpush2.msra.mxu0 0.0
        %694 = vmatprep.subr.mxu0 0.0
        %695 = vmatpush2.msra.mxu0 0.0
        %696 = vmatprep.subr.mxu0 0.0
        %697 = vmatpush2.msra.mxu0 0.0
        %698 = vmatprep.subr.mxu0 0.0
        %699 = vmatpush2.msra.mxu0 0.0
        %700 = vmatprep.subr.mxu0 0.0
        %701 = vmatpush2.msra.mxu0 0.0
        %702 = vmatprep.subr.mxu0 0.0
        %703 = vmatpush2.msra.mxu0 0.0
        %704 = vmatprep.subr.mxu0 0.0
        %705 = vmatpush2.msra.mxu0 0.0
        %706 = vmatprep.subr.mxu0 0.0
        %707 = vmatpush2.msra.mxu0 0.0
        %708 = vmatprep.subr.mxu0 0.0
        %709 = vmatpush2.msra.mxu0 0.0
        %710 = vmatprep.mubr.f32.mxu0 0.0
        %711 = vmatmul.mubr.f32.gmra.mxu0 %v255
        %v712 = vpop.f32.mrf.mxu0
        %v713 = vadd.f32 0.0, %v712
        %v714 = vpop.f32.mrf.mxu0
        %715 = vmatprep.mubr.f32.mxu0 0.0
        %716 = vmatmul.mubr.f32.gmra.mxu0 %v258
        %v717 = vpop.f32.mrf.mxu0
        %v718 = vadd.f32 0.0, %v717
        %v719 = vpop.f32.mrf.mxu0
        %720 = vmatprep.mubr.f32.mxu0 0.0
        %721 = vmatmul.mubr.f32.gmra.mxu0 %v261
        %v722 = vpop.f32.mrf.mxu0
        %v723 = vadd.f32 0.0, %v722
        %v724 = vpop.f32.mrf.mxu0
        %725 = vmatprep.mubr.f32.mxu0 0.0
        %726 = vmatmul.mubr.f32.gmra.mxu0 %v264
        %v727 = vpop.f32.mrf.mxu0
        %v728 = vadd.f32 0.0, %v727
        %v729 = vpop.f32.mrf.mxu0
        %730 = vdwg.mxu0
        %v732 = vsel %vm253, %v713, 0
        %v735 = vsel %vm253, %v718, 0
        %v738 = vsel %vm253, %v723, 0
        %v741 = vsel %vm253, %v728, 0
        %743 = vmatprep.subr.mxu0 0.0
        %744 = vmatpush1.msra.mxu0 0.0
        %745 = vmatprep.subr.mxu0 0.0
        %746 = vmatpush1.msra.mxu0 0.0
        %747 = vmatprep.subr.mxu0 0.0
        %748 = vmatpush1.msra.mxu0 0.0
        %749 = vmatprep.subr.mxu0 0.0
        %750 = vmatpush1.msra.mxu0 0.0
        %751 = vmatprep.subr.mxu0 0.0
        %752 = vmatpush1.msra.mxu0 0.0
        %753 = vmatprep.subr.mxu0 0.0
        %754 = vmatpush1.msra.mxu0 0.0
        %755 = vmatprep.subr.mxu0 0.0
        %756 = vmatpush1.msra.mxu0 0.0
        %757 = vmatprep.subr.mxu0 0.0
        %758 = vmatpush1.msra.mxu0 0.0
        %759 = vmatprep.subr.mxu0 0.0
        %760 = vmatpush1.msra.mxu0 0.0
        %761 = vmatprep.subr.mxu0 0.0
        %762 = vmatpush1.msra.mxu0 0.0
        %763 = vmatprep.subr.mxu0 0.0
        %764 = vmatpush1.msra.mxu0 0.0
        %765 = vmatprep.subr.mxu0 0.0
        %766 = vmatpush1.msra.mxu0 0.0
        %767 = vmatprep.subr.mxu0 0.0
        %768 = vmatpush1.msra.mxu0 0.0
        %769 = vmatprep.subr.mxu0 0.0
        %770 = vmatpush1.msra.mxu0 0.0
        %771 = vmatprep.subr.mxu0 0.0
        %772 = vmatpush1.msra.mxu0 %v250
        %773 = vmatprep.subr.mxu0 0.0
        %774 = vmatpush1.msra.mxu0 %v249
        %775 = vmatprep.subr.mxu0 0.0
        %776 = vmatpush2.msra.mxu0 0.0
        %777 = vmatprep.subr.mxu0 0.0
        %778 = vmatpush2.msra.mxu0 0.0
        %779 = vmatprep.subr.mxu0 0.0
        %780 = vmatpush2.msra.mxu0 0.0
        %781 = vmatprep.subr.mxu0 0.0
        %782 = vmatpush2.msra.mxu0 0.0
        %783 = vmatprep.subr.mxu0 0.0
        %784 = vmatpush2.msra.mxu0 0.0
        %785 = vmatprep.subr.mxu0 0.0
        %786 = vmatpush2.msra.mxu0 0.0
        %787 = vmatprep.subr.mxu0 0.0
        %788 = vmatpush2.msra.mxu0 0.0
        %789 = vmatprep.subr.mxu0 0.0
        %790 = vmatpush2.msra.mxu0 0.0
        %791 = vmatprep.subr.mxu0 0.0
        %792 = vmatpush2.msra.mxu0 0.0
        %793 = vmatprep.subr.mxu0 0.0
        %794 = vmatpush2.msra.mxu0 0.0
        %795 = vmatprep.subr.mxu0 0.0
        %796 = vmatpush2.msra.mxu0 0.0
        %797 = vmatprep.subr.mxu0 0.0
        %798 = vmatpush2.msra.mxu0 0.0
        %799 = vmatprep.subr.mxu0 0.0
        %800 = vmatpush2.msra.mxu0 0.0
        %801 = vmatprep.subr.mxu0 0.0
        %802 = vmatpush2.msra.mxu0 0.0
        %803 = vmatprep.subr.mxu0 0.0
        %804 = vmatpush2.msra.mxu0 0.0
        %805 = vmatprep.subr.mxu0 0.0
        %806 = vmatpush2.msra.mxu0 0.0
        %807 = vmatprep.mubr.f32.mxu0 0.0
        %808 = vmatmul.mubr.f32.gmra.mxu0 %v732
        %v809 = vpop.f32.mrf.mxu0
        %v810 = vadd.f32 0.0, %v809
        %v811 = vpop.f32.mrf.mxu0
        %812 = vmatprep.mubr.f32.mxu0 0.0
        %813 = vmatmul.mubr.f32.gmra.mxu0 %v735
        %v814 = vpop.f32.mrf.mxu0
        %v815 = vadd.f32 0.0, %v814
        %v816 = vpop.f32.mrf.mxu0
        %817 = vmatprep.mubr.f32.mxu0 0.0
        %818 = vmatmul.mubr.f32.gmra.mxu0 %v738
        %v819 = vpop.f32.mrf.mxu0
        %v820 = vadd.f32 0.0, %v819
        %v821 = vpop.f32.mrf.mxu0
        %822 = vmatprep.mubr.f32.mxu0 0.0
        %823 = vmatmul.mubr.f32.gmra.mxu0 %v741
        %v824 = vpop.f32.mrf.mxu0
        %v825 = vadd.f32 0.0, %v824
        %v826 = vpop.f32.mrf.mxu0
        %827 = vdwg.mxu0
        %s828 = scalar_lea.vmem %s240, 64 [#allocation8]
        %829 = vst.msk [vmem:[%s828] sm:$0xff] %vm448, %v810
        %830 = vst.msk [vmem:[%s828 + $0x8] sm:$0xff] %vm448, %v815
        %831 = vst.msk [vmem:[%s828 + $0x10] sm:$0xff] %vm448, %v820
        %832 = vst.msk [vmem:[%s828 + $0x18] sm:$0xff] %vm448, %v825
        %s833 = scalar_lea.vmem %s210, 48 [#allocation2]
        %v834 = vld [vmem:[%s833] sm:$0xff]
        %v835 = vld [vmem:[%s833 + $0x8] sm:$0xff]
        %836 = vmatprep.subr.mxu0 0.0
        %837 = vmatpush1.msra.mxu0 0.0
        %838 = vmatprep.subr.mxu0 0.0
        %839 = vmatpush1.msra.mxu0 0.0
        %840 = vmatprep.subr.mxu0 0.0
        %841 = vmatpush1.msra.mxu0 0.0
        %842 = vmatprep.subr.mxu0 0.0
        %843 = vmatpush1.msra.mxu0 0.0
        %844 = vmatprep.subr.mxu0 0.0
        %845 = vmatpush1.msra.mxu0 0.0
        %846 = vmatprep.subr.mxu0 0.0
        %847 = vmatpush1.msra.mxu0 0.0
        %848 = vmatprep.subr.mxu0 0.0
        %849 = vmatpush1.msra.mxu0 0.0
        %850 = vmatprep.subr.mxu0 0.0
        %851 = vmatpush1.msra.mxu0 0.0
        %852 = vmatprep.subr.mxu0 0.0
        %853 = vmatpush1.msra.mxu0 0.0
        %854 = vmatprep.subr.mxu0 0.0
        %855 = vmatpush1.msra.mxu0 0.0
        %856 = vmatprep.subr.mxu0 0.0
        %857 = vmatpush1.msra.mxu0 0.0
        %858 = vmatprep.subr.mxu0 0.0
        %859 = vmatpush1.msra.mxu0 0.0
        %860 = vmatprep.subr.mxu0 0.0
        %861 = vmatpush1.msra.mxu0 0.0
        %862 = vmatprep.subr.mxu0 0.0
        %863 = vmatpush1.msra.mxu0 0.0
        %864 = vmatprep.subr.mxu0 0.0
        %865 = vmatpush1.msra.mxu0 %v835
        %866 = vmatprep.subr.mxu0 0.0
        %867 = vmatpush1.msra.mxu0 %v834
        %868 = vmatprep.subr.mxu0 0.0
        %869 = vmatpush2.msra.mxu0 0.0
        %870 = vmatprep.subr.mxu0 0.0
        %871 = vmatpush2.msra.mxu0 0.0
        %872 = vmatprep.subr.mxu0 0.0
        %873 = vmatpush2.msra.mxu0 0.0
        %874 = vmatprep.subr.mxu0 0.0
        %875 = vmatpush2.msra.mxu0 0.0
        %876 = vmatprep.subr.mxu0 0.0
        %877 = vmatpush2.msra.mxu0 0.0
        %878 = vmatprep.subr.mxu0 0.0
        %879 = vmatpush2.msra.mxu0 0.0
        %880 = vmatprep.subr.mxu0 0.0
        %881 = vmatpush2.msra.mxu0 0.0
        %882 = vmatprep.subr.mxu0 0.0
        %883 = vmatpush2.msra.mxu0 0.0
        %884 = vmatprep.subr.mxu0 0.0
        %885 = vmatpush2.msra.mxu0 0.0
        %886 = vmatprep.subr.mxu0 0.0
        %887 = vmatpush2.msra.mxu0 0.0
        %888 = vmatprep.subr.mxu0 0.0
        %889 = vmatpush2.msra.mxu0 0.0
        %890 = vmatprep.subr.mxu0 0.0
        %891 = vmatpush2.msra.mxu0 0.0
        %892 = vmatprep.subr.mxu0 0.0
        %893 = vmatpush2.msra.mxu0 0.0
        %894 = vmatprep.subr.mxu0 0.0
        %895 = vmatpush2.msra.mxu0 0.0
        %896 = vmatprep.subr.mxu0 0.0
        %897 = vmatpush2.msra.mxu0 0.0
        %898 = vmatprep.subr.mxu0 0.0
        %899 = vmatpush2.msra.mxu0 0.0
        %900 = vmatprep.mubr.f32.mxu0 0.0
        %901 = vmatmul.mubr.f32.gmra.mxu0 %v255
        %v902 = vpop.f32.mrf.mxu0
        %v903 = vadd.f32 0.0, %v902
        %v904 = vpop.f32.mrf.mxu0
        %905 = vmatprep.mubr.f32.mxu0 0.0
        %906 = vmatmul.mubr.f32.gmra.mxu0 %v258
        %v907 = vpop.f32.mrf.mxu0
        %v908 = vadd.f32 0.0, %v907
        %v909 = vpop.f32.mrf.mxu0
        %910 = vmatprep.mubr.f32.mxu0 0.0
        %911 = vmatmul.mubr.f32.gmra.mxu0 %v261
        %v912 = vpop.f32.mrf.mxu0
        %v913 = vadd.f32 0.0, %v912
        %v914 = vpop.f32.mrf.mxu0
        %915 = vmatprep.mubr.f32.mxu0 0.0
        %916 = vmatmul.mubr.f32.gmra.mxu0 %v264
        %v917 = vpop.f32.mrf.mxu0
        %v918 = vadd.f32 0.0, %v917
        %v919 = vpop.f32.mrf.mxu0
        %920 = vdwg.mxu0
        %v922 = vsel %vm253, %v903, 0
        %v925 = vsel %vm253, %v908, 0
        %v928 = vsel %vm253, %v913, 0
        %v931 = vsel %vm253, %v918, 0
        %933 = vmatprep.subr.mxu0 0.0
        %934 = vmatpush1.msra.mxu0 0.0
        %935 = vmatprep.subr.mxu0 0.0
        %936 = vmatpush1.msra.mxu0 0.0
        %937 = vmatprep.subr.mxu0 0.0
        %938 = vmatpush1.msra.mxu0 0.0
        %939 = vmatprep.subr.mxu0 0.0
        %940 = vmatpush1.msra.mxu0 0.0
        %941 = vmatprep.subr.mxu0 0.0
        %942 = vmatpush1.msra.mxu0 0.0
        %943 = vmatprep.subr.mxu0 0.0
        %944 = vmatpush1.msra.mxu0 0.0
        %945 = vmatprep.subr.mxu0 0.0
        %946 = vmatpush1.msra.mxu0 0.0
        %947 = vmatprep.subr.mxu0 0.0
        %948 = vmatpush1.msra.mxu0 0.0
        %949 = vmatprep.subr.mxu0 0.0
        %950 = vmatpush1.msra.mxu0 0.0
        %951 = vmatprep.subr.mxu0 0.0
        %952 = vmatpush1.msra.mxu0 0.0
        %953 = vmatprep.subr.mxu0 0.0
        %954 = vmatpush1.msra.mxu0 0.0
        %955 = vmatprep.subr.mxu0 0.0
        %956 = vmatpush1.msra.mxu0 0.0
        %957 = vmatprep.subr.mxu0 0.0
        %958 = vmatpush1.msra.mxu0 0.0
        %959 = vmatprep.subr.mxu0 0.0
        %960 = vmatpush1.msra.mxu0 0.0
        %961 = vmatprep.subr.mxu0 0.0
        %962 = vmatpush1.msra.mxu0 %v250
        %963 = vmatprep.subr.mxu0 0.0
        %964 = vmatpush1.msra.mxu0 %v249
        %965 = vmatprep.subr.mxu0 0.0
        %966 = vmatpush2.msra.mxu0 0.0
        %967 = vmatprep.subr.mxu0 0.0
        %968 = vmatpush2.msra.mxu0 0.0
        %969 = vmatprep.subr.mxu0 0.0
        %970 = vmatpush2.msra.mxu0 0.0
        %971 = vmatprep.subr.mxu0 0.0
        %972 = vmatpush2.msra.mxu0 0.0
        %973 = vmatprep.subr.mxu0 0.0
        %974 = vmatpush2.msra.mxu0 0.0
        %975 = vmatprep.subr.mxu0 0.0
        %976 = vmatpush2.msra.mxu0 0.0
        %977 = vmatprep.subr.mxu0 0.0
        %978 = vmatpush2.msra.mxu0 0.0
        %979 = vmatprep.subr.mxu0 0.0
        %980 = vmatpush2.msra.mxu0 0.0
        %981 = vmatprep.subr.mxu0 0.0
        %982 = vmatpush2.msra.mxu0 0.0
        %983 = vmatprep.subr.mxu0 0.0
        %984 = vmatpush2.msra.mxu0 0.0
        %985 = vmatprep.subr.mxu0 0.0
        %986 = vmatpush2.msra.mxu0 0.0
        %987 = vmatprep.subr.mxu0 0.0
        %988 = vmatpush2.msra.mxu0 0.0
        %989 = vmatprep.subr.mxu0 0.0
        %990 = vmatpush2.msra.mxu0 0.0
        %991 = vmatprep.subr.mxu0 0.0
        %992 = vmatpush2.msra.mxu0 0.0
        %993 = vmatprep.subr.mxu0 0.0
        %994 = vmatpush2.msra.mxu0 0.0
        %995 = vmatprep.subr.mxu0 0.0
        %996 = vmatpush2.msra.mxu0 0.0
        %997 = vmatprep.mubr.f32.mxu0 0.0
        %998 = vmatmul.mubr.f32.gmra.mxu0 %v922
        %v999 = vpop.f32.mrf.mxu0
        %v1000 = vadd.f32 0.0, %v999
        %v1001 = vpop.f32.mrf.mxu0
        %1002 = vmatprep.mubr.f32.mxu0 0.0
        %1003 = vmatmul.mubr.f32.gmra.mxu0 %v925
        %v1004 = vpop.f32.mrf.mxu0
        %v1005 = vadd.f32 0.0, %v1004
        %v1006 = vpop.f32.mrf.mxu0
        %1007 = vmatprep.mubr.f32.mxu0 0.0
        %1008 = vmatmul.mubr.f32.gmra.mxu0 %v928
        %v1009 = vpop.f32.mrf.mxu0
        %v1010 = vadd.f32 0.0, %v1009
        %v1011 = vpop.f32.mrf.mxu0
        %1012 = vmatprep.mubr.f32.mxu0 0.0
        %1013 = vmatmul.mubr.f32.gmra.mxu0 %v931
        %v1014 = vpop.f32.mrf.mxu0
        %v1015 = vadd.f32 0.0, %v1014
        %v1016 = vpop.f32.mrf.mxu0
        %1017 = vdwg.mxu0
        %s1018 = scalar_lea.vmem %s240, 96 [#allocation8]
        %1019 = vst.msk [vmem:[%s1018] sm:$0xff] %vm448, %v1000
        %1020 = vst.msk [vmem:[%s1018 + $0x8] sm:$0xff] %vm448, %v1005
        %1021 = vst.msk [vmem:[%s1018 + $0x10] sm:$0xff] %vm448, %v1010
        %1022 = vst.msk [vmem:[%s1018 + $0x18] sm:$0xff] %vm448, %v1015
        %s1023 = sand.u32 %s116, 1
        %s1024 = scalar_lea.sflag [#allocation4], %s1023
        %s1025 = sand.u32 %s116, 1
        %s1026 = smul.addr %s1025, 128
        %s1027 = scalar_lea.vmem [#allocation8], %s1026
        // Predicated region
        $region45: #{upsample.1} parent=31 // pred_check
          %p1028 = pneg %p126
        $region46: #{upsample.1} parent=31 // pred_check_branch
          %1030 = sbr.rel (%p1028) target = $region48
        $region47: #{upsample.1} parent=31 // pred_region
          %s1031 = smul.u32 4, %s25
          %s1032 = smul.u32 4, %s26
          %s1034 = ssub.s32 2048, 2048
          %1035 = vsyncadd %s1024, %s1034
          %s1036 = smul.addr %s1031, 4
          %s1037 = sadd.s32 %s1032, %s1036
          %s1038 = smul.addr %s1037, 128
          %s1039 = scalar_lea.hbm %s3, %s1038
          %s1040 = sshll.u32 %s1027, 4
          %s1041 = int_to_ptr.vmem [resolvable:$true] %s1040
          %1046 = dma.vmem_to_hbm [thread:$0]  %s1041, 2048, %s1039, %s1024, 128, 128, 8
        $region48: #{upsample.1} parent=31 // pred_fallthru
          _
      $region32: #{upsample.1} parent=5 // pred_fallthru
        _
      %p1047 = scmp.le.s32.totalorder 2, %s16
      // Predicated region
      $region49: #{upsample.1} parent=5 // pred_check
        %p1048 = pneg %p1047
      $region50: #{upsample.1} parent=5 // pred_check_branch
        %1050 = sbr.rel (%p1048) target = $region52
      $region51: #{upsample.1} parent=5 // pred_region
        %s1051 = ssub.s32 %s16, 2
        // Predicated region
        $region53: #{upsample.1} parent=51 // pred_check
          %p1052 = pneg %p132
        $region54: #{upsample.1} parent=51 // pred_check_branch
          %1054 = sbr.rel (%p1052) target = $region56
        $region55: #{upsample.1} parent=51 // pred_region
          %s1055 = sand.u32 %s117, 1
          %s1056 = scalar_lea.sflag [#allocation4], %s1055
          %s1057 = sand.u32 %s117, 1
          %s1058 = smul.addr %s1057, 128
          %s1059 = scalar_lea.vmem [#allocation8], %s1058
          %1060 = dma.done %s1056, 2048
        $region56: #{upsample.1} parent=51 // pred_fallthru
          _
      $region52: #{upsample.1} parent=5 // pred_fallthru
        _
    $region6: #{upsample.1} parent=1 // loop_footer
      %s20 = sadd.s32 1, %s16
    $region7: #{upsample.1} parent=1 // loop_footer_branch
      %15 = sbr.rel target = $region3
    $region8: #{upsample.1} parent=1 // loop_exit
      _
    %1061 = vsyncpa [#allocation3], 1
    %s1062 = scalar_lea.sflag [#allocation3], 1
    %1063 = vsyncpa %s1062, 1
    %1064 = vsyncpa [#allocation6], 1
    %1065 = vsyncpa [#allocation4], 1
    %s1066 = scalar_lea.sflag [#allocation4], 1
    %1067 = vsyncpa %s1066, 1

</llo_original>
